<compile_context>
chip_gen: v7x
topology: tpu7x:2x2x1
jax: 0.10.0
libtpu: 0.0.40
codegen_flags: <defaults>
</compile_context>

<pallas_src>
import jax
import jax.numpy as jnp
from jax.experimental import pallas as pl
from jax.experimental.pallas import tpu as pltpu


_SMALL_BYPASS_BYTES = 1 << 20  # below this, kernel-launch overhead dominates


def _copy_kernel(x_ref, o_ref):
    # Whole-tile copy: the only "compute" the reference module could imply.
    o_ref[...] = x_ref[...]


def _pick_lane_width(total_elems):
    """Widest lane width (multiple of 128) that divides total_elems, else None."""
    for lane_w in (8192, 4096, 2048, 1024, 512, 256, 128):
        if total_elems % lane_w == 0:
            return lane_w
    return None


def _pallas_identity_copy(x: jax.Array) -> jax.Array:
    """Materialized identity copy of `x` via a lane-dense, tiled Pallas kernel."""
    orig_shape = x.shape
    dtype = x.dtype
    itemsize = jnp.dtype(dtype).itemsize
    total = x.size

    flat = x.reshape(total)
    lane_w = _pick_lane_width(total)
    if lane_w is None:
        # No 128-multiple factorization: pad to a multiple of 1024 (8x128) so
        # every store is a full-width, unmasked vst; slice the pad off after.
        lane_w = 1024
        padded_total = pl.cdiv(total, lane_w) * lane_w
        flat = jnp.pad(flat, (0, padded_total - total))
    padded_total = flat.size
    rows = padded_total // lane_w
    x2d = flat.reshape(rows, lane_w)

    # ~2 MiB per tile: amortizes the ~0.35 us per-grid-step overhead while
    # keeping double-buffered in+out tiles (~8 MiB) inside every generation's
    # scoped-VMEM default (v5e 16 MiB, v6e/v7x 32 MiB).
    TILE_BYTES = 2 * 1024 * 1024
    tile_r = max(8, (TILE_BYTES // (lane_w * itemsize)) // 8 * 8)
    tile_r = min(tile_r, rows)

    # v7x: a 1-step grid pins the whole copy on one TensorCore. For tensors
    # big enough to be bandwidth-bound, split into >= 2 blocks so the
    # "parallel" grid axis can be sharded across both TCs.
    total_bytes = padded_total * itemsize
    if tile_r == rows and rows >= 16 and total_bytes >= (512 * 1024):
        tile_r = max(8, (rows // 2) // 8 * 8)

    grid_r = pl.cdiv(rows, tile_r)

    out2d = pl.pallas_call(
        _copy_kernel,
        out_shape=jax.ShapeDtypeStruct((rows, lane_w), dtype),
        grid=(grid_r,),
        in_specs=[pl.BlockSpec((tile_r, lane_w), lambda i: (i, 0))],
        out_specs=pl.BlockSpec((tile_r, lane_w), lambda i: (i, 0)),
        cost_estimate=pl.CostEstimate(
            flops=0,
            transcendentals=0,
            bytes_accessed=2 * padded_total * itemsize,
        ),
        compiler_params=pltpu.CompilerParams(
            dimension_semantics=("parallel",),
            vmem_limit_bytes=32 * 1024 * 1024,
        ),
    )(x2d)

    out_flat = out2d.reshape(padded_total)
    if padded_total != total:
        out_flat = out_flat[:total]
    return out_flat.reshape(orig_shape)


def dilres_forward(x: jax.Array, materialize: bool = False) -> jax.Array:
    """Pallas-backed DilRes forward.

    The reference forward() is a no-op, so by default this returns `x`
    unchanged (no kernel launch, no HBM traffic). Pass materialize=True to
    force a fresh buffer via the tiled Pallas copy (small tensors still bypass
    the kernel since launch overhead would dominate).
    """
    if not materialize:
        return x
    if x.size * jnp.dtype(x.dtype).itemsize < _SMALL_BYPASS_BYTES:
        return x
    return _pallas_identity_copy(x)


if __name__ == "__main__":
    key = jax.random.PRNGKey(0)

    # Small NCHW input consistent with a conv-style module.
    x = jax.random.normal(key, (2, 4, 16, 16), dtype=jnp.float32)

    # Default path: identity short-circuit (the semantically faithful, fastest path).
    y = dilres_forward(x)
    jax.block_until_ready(y)
    assert y.shape == x.shape and y.dtype == x.dtype
    assert bool(jnp.all(y == x))

    # Exercise the Pallas copy kernel itself (lane-dense, single block).
    y_copy = _pallas_identity_copy(x)
    jax.block_until_ready(y_copy)
    assert y_copy.shape == x.shape and y_copy.dtype == x.dtype
    assert bool(jnp.all(y_copy == x))

    # Exercise the pad-to-lane-dense fallback (no 128-multiple factorization).
    x_odd = jax.random.normal(key, (2, 3, 7, 5), dtype=jnp.float32)
    y_odd = _pallas_identity_copy(x_odd)
    jax.block_until_ready(y_odd)
    assert bool(jnp.all(y_odd == x_odd))

    # Exercise the multi-step grid path (>= 2 blocks for v7x TC sharding).
    x_big = jax.random.normal(key, (2, 4, 128, 128), dtype=jnp.float32)
    y_big = _pallas_identity_copy(x_big)
    jax.block_until_ready(y_big)
    assert bool(jnp.all(y_big == x_big))

    print("KERNEL_OK")
</pallas_src>

<mosaic_0001>
module attributes {stable_mosaic.version = 11 : i64} {
  func.func @_copy_kernel(%arg0: i32, %arg1: memref<1x2048xf32, #tpu.memory_space<vmem>>, %arg2: memref<1x2048xf32, #tpu.memory_space<vmem>>) attributes {dimension_semantics = [#tpu.dimension_semantics<parallel>], iteration_bounds = array<i64: 1>, scalar_prefetch = 0 : i64, scratch_operands = 0 : i64, tpu.core_type = #tpu.core_type<tc>, window_params = [{transform_indices = @transform_0, window_bounds = array<i64: 1, 2048>}, {transform_indices = @transform_1, window_bounds = array<i64: 1, 2048>}]} {
    %c0 = arith.constant 0 : index
    %c0_0 = arith.constant 0 : index
    %0 = vector.load %arg1[%c0, %c0_0] : memref<1x2048xf32, #tpu.memory_space<vmem>>, vector<1x2048xf32>
    %c0_1 = arith.constant 0 : index
    %c0_2 = arith.constant 0 : index
    %1 = vector.load %arg2[%c0_1, %c0_2] : memref<1x2048xf32, #tpu.memory_space<vmem>>, vector<1x2048xf32>
    tpu.vector_store %arg2[%c0_1, %c0_2], %0 {strides = array<i32>} : memref<1x2048xf32, #tpu.memory_space<vmem>>, vector<1x2048xf32>,
    return
  }
  func.func @transform_0(%arg0: i32) -> (i32, i32) {
    %c0_i32 = arith.constant 0 : i32
    %c0_i32_0 = arith.constant 0 : i32
    return %arg0, %c0_i32 : i32, i32
  }
  func.func @transform_1(%arg0: i32) -> (i32, i32) {
    %c0_i32 = arith.constant 0 : i32
    %c0_i32_0 = arith.constant 0 : i32
    return %arg0, %c0_i32 : i32, i32
  }
}

</mosaic_0001>

<llo_original>
// kernel: tpu_custom_call.1
$region0: #{tpu_custom_call.1}
  #allocation0 [shape = 'u32[]', space=smem, size = 0x4, offset = 0x4, fixed_abs, tag = 'smem constant byte address 0x4 - core index']
  #allocation1 [shape = 'u32[144,128]{1,0:T(1,128)}', space=vmem, size = 0x12000, scoped, tag = 'internal scratch']
  %s0 = inlined_call_operand.hbm [shape: f32[1,2048], index: 0, kind: input, shape index: {}]
  %s1 = inlined_call_operand.hbm [shape: f32[1,2048], index: 1, kind: output, shape index: {}]
  %s2 = sld [smem:[#allocation0]]
  $region18: #{tpu_custom_call.1} parent=0
    _
  %s4 = ssub.s32 1, %s2
  %s5 = scalar_select 0, %s4, %s2
  $region1: #{tpu_custom_call.1} parent=0
    #allocation2 [shape = 'u8[8192]{0}', space=vmem, size = 0x2000, scoped, tag = 'input window, operand 0, single buffered']
    #allocation3 [shape = 's32[1]{0}', space=sflag, size = 0x4, scoped, tag = 'scoped memory for tpu_custom_call.1']
    #allocation4 [shape = 's32[1]{0}', space=sflag, size = 0x4, scoped, tag = 'scoped memory for tpu_custom_call.1']
    #allocation5 [shape = 'u8[8192]{0}', space=vmem, size = 0x2000, scoped, tag = 'output window, operand 0, single buffered']
    %6 = vsyncpa [#allocation3], 0
    %7 = vsyncpa [#allocation4], 0
    // Predicated region
    $region2: #{tpu_custom_call.1} parent=1 // pred_check
      _
    $region3: #{tpu_custom_call.1} parent=1 // pred_check_branch
      %9 = sbr.rel (0) target = $region5
    $region4: #{tpu_custom_call.1} parent=1 // pred_region
      %s11 = ssub.s32 256, 256
      %12 = vsyncadd [#allocation3], %s11
      %s14 = sshll.u32 [#allocation2], 4
      %s15 = int_to_ptr.vmem [resolvable:$true] %s14
      %17 = dma.hbm_to_vmem [thread:$0]  %s0, 256, %s15, [#allocation3]
    $region5: #{tpu_custom_call.1} parent=1 // pred_fallthru
      _
    // Predicated region
    $region6: #{tpu_custom_call.1} parent=1 // pred_check
      _
    $region7: #{tpu_custom_call.1} parent=1 // pred_check_branch
      %19 = sbr.rel (0) target = $region9
    $region8: #{tpu_custom_call.1} parent=1 // pred_region
      %20 = dma.done [#allocation3], 256
    $region9: #{tpu_custom_call.1} parent=1 // pred_fallthru
      _
    %v21 = vld [vmem:[#allocation2] sm:$0xff]
    %v22 = vld [vmem:[#allocation2 + $0x8] sm:$0xff]
    %23 = vst [vmem:[#allocation5] sm:$0xff] %v21
    %24 = vst [vmem:[#allocation5 + $0x8] sm:$0xff] %v22
    // Predicated region
    $region10: #{tpu_custom_call.1} parent=1 // pred_check
      _
    $region11: #{tpu_custom_call.1} parent=1 // pred_check_branch
      %26 = sbr.rel (0) target = $region13
    $region12: #{tpu_custom_call.1} parent=1 // pred_region
      %s28 = ssub.s32 256, 256
      %29 = vsyncadd [#allocation4], %s28
      %s31 = sshll.u32 [#allocation5], 4
      %s32 = int_to_ptr.vmem [resolvable:$true] %s31
      %34 = dma.vmem_to_hbm [thread:$0]  %s32, 256, %s1, [#allocation4]
    $region13: #{tpu_custom_call.1} parent=1 // pred_fallthru
      _
    // Predicated region
    $region14: #{tpu_custom_call.1} parent=1 // pred_check
      _
    $region15: #{tpu_custom_call.1} parent=1 // pred_check_branch
      %36 = sbr.rel (0) target = $region17
    $region16: #{tpu_custom_call.1} parent=1 // pred_region
      %37 = dma.done [#allocation4], 256
    $region17: #{tpu_custom_call.1} parent=1 // pred_fallthru
      _
    %38 = vsyncpa [#allocation3], 1
    %39 = vsyncpa [#allocation4], 1

</llo_original>
